<compile_context>
chip_gen: v7x
topology: tpu7x:2x2x1
jax: 0.10.0
libtpu: 0.0.40
codegen_flags: <defaults>
</compile_context>

<pallas_src>
import functools

import jax
import jax.numpy as jnp
from jax.experimental import pallas as pl
from jax.experimental.pallas import tpu as pltpu

IN_FEATURES = 28 * 28
HIDDEN = 64
NUM_CLASSES = 10
PADDED_CLASSES = 128                 # lane-dense output width
NEG_BIG = -1e30                      # padded-class bias; exp underflows to 0
VMEM_LIMIT_BYTES = 48 * 1024 * 1024  # room for f32 x tiles at large tile_b


def _round_up(x, m):
    return ((x + m - 1) // m) * m


def _default_max_tile_b():
    """Per-generation batch-tile ceiling (HBM-bound kernel: amortize the
    ~0.35us per-step pipeline overhead; keep VMEM comfortable)."""
    try:
        kind = jax.devices()[0].device_kind.lower()
    except Exception:
        return 2048
    if "v5" in kind:
        return 2048          # v5e: most bandwidth-starved, smaller scoped VMEM
    if "7" in kind:
        return 4096          # v7x: ~3.2 TB/s HBM needs bigger steps
    return 2048              # v6e and others


def _choose_tiling(batch, max_tile_b):
    """Pick (tile_b, padded_batch): pad at most a handful of rows and give
    multi-TC chips at least 2 grid steps when there is enough work."""
    n_steps = pl.cdiv(batch, max_tile_b)
    if batch >= 256 and n_steps < 2:
        n_steps = 2
    tile_b = _round_up(pl.cdiv(batch, n_steps), 8)
    return tile_b, n_steps * tile_b


def mlp_kernel(x_ref,
               w1_ref, b1_ref,
               w2_ref, b2_ref,
               w3_ref, b3_ref,
               w4_ref, b4_ref,
               w5_ref, b5_ref,
               o_ref):
    # f32 x streamed from HBM; cast to bf16 in-kernel (VPU slack is huge).
    x = x_ref[...].astype(jnp.bfloat16)

    # fc1..fc4 + ReLU  (bf16 x bf16 -> f32 accumulate on MXU)
    h = jnp.dot(x, w1_ref[...], preferred_element_type=jnp.float32) + b1_ref[...]
    h = jnp.maximum(h, 0.0).astype(jnp.bfloat16)
    h = jnp.dot(h, w2_ref[...], preferred_element_type=jnp.float32) + b2_ref[...]
    h = jnp.maximum(h, 0.0).astype(jnp.bfloat16)
    h = jnp.dot(h, w3_ref[...], preferred_element_type=jnp.float32) + b3_ref[...]
    h = jnp.maximum(h, 0.0).astype(jnp.bfloat16)
    h = jnp.dot(h, w4_ref[...], preferred_element_type=jnp.float32) + b4_ref[...]
    h = jnp.maximum(h, 0.0).astype(jnp.bfloat16)

    # fc5 -> (tile_b, 128) padded logits; padded columns carry NEG_BIG bias.
    z = jnp.dot(h, w5_ref[...], preferred_element_type=jnp.float32) + b5_ref[...]

    # log_softmax along classes (padding contributes exp(.) == 0).
    z_max = jnp.max(z, axis=-1, keepdims=True)
    z_shift = z - z_max
    lse = jnp.log(jnp.sum(jnp.exp(z_shift), axis=-1, keepdims=True))
    o_ref[...] = (z_shift - lse).astype(o_ref.dtype)


def pack_params(params):
    """One-time weight prep: bf16 weights, f32 biases, fc5 padded to 128 lanes."""
    packed = []
    for i in range(1, 5):
        packed.append(params[f"w{i}"].astype(jnp.bfloat16))
        packed.append(params[f"b{i}"].astype(jnp.float32))
    w5 = jnp.pad(params["w5"],
                 ((0, 0), (0, PADDED_CLASSES - NUM_CLASSES))).astype(jnp.bfloat16)
    b5 = jnp.pad(params["b5"],
                 ((0, 0), (0, PADDED_CLASSES - NUM_CLASSES)),
                 constant_values=NEG_BIG).astype(jnp.float32)
    packed += [w5, b5]
    return tuple(packed)


@functools.partial(jax.jit, static_argnames=("max_tile_b",))
def net_forward(x, packed_params, max_tile_b=None):
    """x: (B, 784) float32; packed_params: output of pack_params()."""
    if max_tile_b is None:
        max_tile_b = _default_max_tile_b()
    B = x.shape[0]
    tile_b, b_pad = _choose_tiling(B, max_tile_b)
    if b_pad != B:                      # at most a few tail rows, zero-filled
        x = jnp.pad(x, ((0, b_pad - B), (0, 0)))

    grid = (b_pad // tile_b,)

    in_specs = [pl.BlockSpec((tile_b, IN_FEATURES), lambda gi: (gi, 0))]
    # Constant index_maps: weights/biases stay VMEM-resident across the grid.
    in_specs += [pl.BlockSpec(p.shape, lambda gi: (0, 0)) for p in packed_params]

    flops = 2 * b_pad * (IN_FEATURES * HIDDEN
                         + 3 * HIDDEN * HIDDEN
                         + HIDDEN * PADDED_CLASSES)
    transcendentals = b_pad * (PADDED_CLASSES + 1)            # exp + log per row
    bytes_accessed = (x.size * 4                              # f32 x stream
                      + sum(int(p.size) * p.dtype.itemsize for p in packed_params)
                      + b_pad * PADDED_CLASSES * 4)           # f32 output

    out = pl.pallas_call(
        mlp_kernel,
        out_shape=jax.ShapeDtypeStruct((b_pad, PADDED_CLASSES), jnp.float32),
        grid=grid,
        in_specs=in_specs,
        out_specs=pl.BlockSpec((tile_b, PADDED_CLASSES), lambda gi: (gi, 0)),
        compiler_params=pltpu.CompilerParams(
            dimension_semantics=("parallel",),
            vmem_limit_bytes=VMEM_LIMIT_BYTES),
        cost_estimate=pl.CostEstimate(flops=flops,
                                      transcendentals=transcendentals,
                                      bytes_accessed=bytes_accessed),
    )(x, *packed_params)
    return out[:B, :NUM_CLASSES]


def init_params(key):
    """Deterministic init matching nn.Linear shapes (weights stored (in,out))."""
    sizes = [(IN_FEATURES, HIDDEN), (HIDDEN, HIDDEN), (HIDDEN, HIDDEN),
             (HIDDEN, HIDDEN), (HIDDEN, NUM_CLASSES)]
    params = {}
    for i, (fan_in, fan_out) in enumerate(sizes, start=1):
        key, kw, kb = jax.random.split(key, 3)
        bound = 1.0 / jnp.sqrt(fan_in)
        params[f"w{i}"] = jax.random.uniform(
            kw, (fan_in, fan_out), minval=-bound, maxval=bound, dtype=jnp.float32)
        params[f"b{i}"] = jax.random.uniform(
            kb, (1, fan_out), minval=-bound, maxval=bound, dtype=jnp.float32)
    return params


def reference_forward(x, params):
    """Pure-JAX reference using the same bf16-operand / f32-accumulate math."""
    h = x.astype(jnp.bfloat16)
    for i in range(1, 5):
        z = jnp.dot(h, params[f"w{i}"].astype(jnp.bfloat16),
                    preferred_element_type=jnp.float32) + params[f"b{i}"]
        h = jnp.maximum(z, 0.0).astype(jnp.bfloat16)
    z = jnp.dot(h, params["w5"].astype(jnp.bfloat16),
                preferred_element_type=jnp.float32) + params["b5"]
    return jax.nn.log_softmax(z, axis=1)


if __name__ == "__main__":
    key = jax.random.PRNGKey(0)
    key, kx = jax.random.split(key)
    B = 8
    x = jax.random.normal(kx, (B, IN_FEATURES), dtype=jnp.float32)
    params = init_params(key)
    packed = pack_params(params)

    out = net_forward(x, packed)
    out = jax.block_until_ready(out)

    ref = reference_forward(x, params)
    assert out.shape == (B, NUM_CLASSES)
    assert jnp.allclose(out, ref, atol=1e-3, rtol=1e-3), (
        f"max abs err {jnp.max(jnp.abs(out - ref))}")
    print("KERNEL_OK")
</pallas_src>

<mosaic_0001>
module attributes {stable_mosaic.version = 11 : i64} {
  func.func @mlp_kernel(%arg0: i32, %arg1: memref<8x784xf32, #tpu.memory_space<vmem>>, %arg2: memref<784x64xbf16, #tpu.memory_space<vmem>>, %arg3: memref<1x64xf32, #tpu.memory_space<vmem>>, %arg4: memref<64x64xbf16, #tpu.memory_space<vmem>>, %arg5: memref<1x64xf32, #tpu.memory_space<vmem>>, %arg6: memref<64x64xbf16, #tpu.memory_space<vmem>>, %arg7: memref<1x64xf32, #tpu.memory_space<vmem>>, %arg8: memref<64x64xbf16, #tpu.memory_space<vmem>>, %arg9: memref<1x64xf32, #tpu.memory_space<vmem>>, %arg10: memref<64x128xbf16, #tpu.memory_space<vmem>>, %arg11: memref<1x128xf32, #tpu.memory_space<vmem>>, %arg12: memref<8x128xf32, #tpu.memory_space<vmem>>) attributes {dimension_semantics = [#tpu.dimension_semantics<parallel>], iteration_bounds = array<i64: 1>, scalar_prefetch = 0 : i64, scratch_operands = 0 : i64, tpu.core_type = #tpu.core_type<tc>, window_params = [{transform_indices = @transform_0, window_bounds = array<i64: 8, 784>}, {pipeline_mode = #tpu.pipeline_mode<synchronous>, transform_indices = @transform_1, window_bounds = array<i64: 784, 64>}, {pipeline_mode = #tpu.pipeline_mode<synchronous>, transform_indices = @transform_2, window_bounds = array<i64: 1, 64>}, {pipeline_mode = #tpu.pipeline_mode<synchronous>, transform_indices = @transform_3, window_bounds = array<i64: 64, 64>}, {pipeline_mode = #tpu.pipeline_mode<synchronous>, transform_indices = @transform_4, window_bounds = array<i64: 1, 64>}, {pipeline_mode = #tpu.pipeline_mode<synchronous>, transform_indices = @transform_5, window_bounds = array<i64: 64, 64>}, {pipeline_mode = #tpu.pipeline_mode<synchronous>, transform_indices = @transform_6, window_bounds = array<i64: 1, 64>}, {pipeline_mode = #tpu.pipeline_mode<synchronous>, transform_indices = @transform_7, window_bounds = array<i64: 64, 64>}, {pipeline_mode = #tpu.pipeline_mode<synchronous>, transform_indices = @transform_8, window_bounds = array<i64: 1, 64>}, {pipeline_mode = #tpu.pipeline_mode<synchronous>, transform_indices = @transform_9, window_bounds = array<i64: 64, 128>}, {pipeline_mode = #tpu.pipeline_mode<synchronous>, transform_indices = @transform_10, window_bounds = array<i64: 1, 128>}, {transform_indices = @transform_11, window_bounds = array<i64: 8, 128>}]} {
    %c0 = arith.constant 0 : index
    %c0_0 = arith.constant 0 : index
    %0 = vector.load %arg1[%c0, %c0_0] : memref<8x784xf32, #tpu.memory_space<vmem>>, vector<8x784xf32>
    %1 = arith.truncf %0 : vector<8x784xf32> to vector<8x784xbf16>
    %c0_1 = arith.constant 0 : index
    %c0_2 = arith.constant 0 : index
    %2 = vector.load %arg2[%c0_1, %c0_2] : memref<784x64xbf16, #tpu.memory_space<vmem>>, vector<784x64xbf16>
    %cst = arith.constant dense<0.000000e+00> : vector<8x64xf32>
    %3 = tpu.matmul %1, %2, %cst {dimension_numbers = #tpu.dot_dimension_numbers<[1], [0], [0], [1], [0, 0, 1, 1], [], []>} : vector<8x784xbf16>, vector<784x64xbf16>, vector<8x64xf32> -> vector<8x64xf32>
    %c0_3 = arith.constant 0 : index
    %c0_4 = arith.constant 0 : index
    %4 = vector.load %arg3[%c0_3, %c0_4] : memref<1x64xf32, #tpu.memory_space<vmem>>, vector<1x64xf32>
    %5 = vector.broadcast %4 : vector<1x64xf32> to vector<8x64xf32>
    %6 = arith.addf %3, %5 : vector<8x64xf32>
    %cst_5 = arith.constant 0.000000e+00 : f32
    %7 = vector.broadcast %cst_5 : f32 to vector<8x64xf32>
    %8 = arith.maximumf %6, %7 : vector<8x64xf32>
    %9 = arith.truncf %8 : vector<8x64xf32> to vector<8x64xbf16>
    %c0_6 = arith.constant 0 : index
    %c0_7 = arith.constant 0 : index
    %10 = vector.load %arg4[%c0_6, %c0_7] : memref<64x64xbf16, #tpu.memory_space<vmem>>, vector<64x64xbf16>
    %cst_8 = arith.constant dense<0.000000e+00> : vector<8x64xf32>
    %11 = tpu.matmul %9, %10, %cst_8 {dimension_numbers = #tpu.dot_dimension_numbers<[1], [0], [0], [1], [0, 0, 1, 1], [], []>} : vector<8x64xbf16>, vector<64x64xbf16>, vector<8x64xf32> -> vector<8x64xf32>
    %c0_9 = arith.constant 0 : index
    %c0_10 = arith.constant 0 : index
    %12 = vector.load %arg5[%c0_9, %c0_10] : memref<1x64xf32, #tpu.memory_space<vmem>>, vector<1x64xf32>
    %13 = vector.broadcast %12 : vector<1x64xf32> to vector<8x64xf32>
    %14 = arith.addf %11, %13 : vector<8x64xf32>
    %cst_11 = arith.constant 0.000000e+00 : f32
    %15 = vector.broadcast %cst_11 : f32 to vector<8x64xf32>
    %16 = arith.maximumf %14, %15 : vector<8x64xf32>
    %17 = arith.truncf %16 : vector<8x64xf32> to vector<8x64xbf16>
    %c0_12 = arith.constant 0 : index
    %c0_13 = arith.constant 0 : index
    %18 = vector.load %arg6[%c0_12, %c0_13] : memref<64x64xbf16, #tpu.memory_space<vmem>>, vector<64x64xbf16>
    %cst_14 = arith.constant dense<0.000000e+00> : vector<8x64xf32>
    %19 = tpu.matmul %17, %18, %cst_14 {dimension_numbers = #tpu.dot_dimension_numbers<[1], [0], [0], [1], [0, 0, 1, 1], [], []>} : vector<8x64xbf16>, vector<64x64xbf16>, vector<8x64xf32> -> vector<8x64xf32>
    %c0_15 = arith.constant 0 : index
    %c0_16 = arith.constant 0 : index
    %20 = vector.load %arg7[%c0_15, %c0_16] : memref<1x64xf32, #tpu.memory_space<vmem>>, vector<1x64xf32>
    %21 = vector.broadcast %20 : vector<1x64xf32> to vector<8x64xf32>
    %22 = arith.addf %19, %21 : vector<8x64xf32>
    %cst_17 = arith.constant 0.000000e+00 : f32
    %23 = vector.broadcast %cst_17 : f32 to vector<8x64xf32>
    %24 = arith.maximumf %22, %23 : vector<8x64xf32>
    %25 = arith.truncf %24 : vector<8x64xf32> to vector<8x64xbf16>
    %c0_18 = arith.constant 0 : index
    %c0_19 = arith.constant 0 : index
    %26 = vector.load %arg8[%c0_18, %c0_19] : memref<64x64xbf16, #tpu.memory_space<vmem>>, vector<64x64xbf16>
    %cst_20 = arith.constant dense<0.000000e+00> : vector<8x64xf32>
    %27 = tpu.matmul %25, %26, %cst_20 {dimension_numbers = #tpu.dot_dimension_numbers<[1], [0], [0], [1], [0, 0, 1, 1], [], []>} : vector<8x64xbf16>, vector<64x64xbf16>, vector<8x64xf32> -> vector<8x64xf32>
    %c0_21 = arith.constant 0 : index
    %c0_22 = arith.constant 0 : index
    %28 = vector.load %arg9[%c0_21, %c0_22] : memref<1x64xf32, #tpu.memory_space<vmem>>, vector<1x64xf32>
    %29 = vector.broadcast %28 : vector<1x64xf32> to vector<8x64xf32>
    %30 = arith.addf %27, %29 : vector<8x64xf32>
    %cst_23 = arith.constant 0.000000e+00 : f32
    %31 = vector.broadcast %cst_23 : f32 to vector<8x64xf32>
    %32 = arith.maximumf %30, %31 : vector<8x64xf32>
    %33 = arith.truncf %32 : vector<8x64xf32> to vector<8x64xbf16>
    %c0_24 = arith.constant 0 : index
    %c0_25 = arith.constant 0 : index
    %34 = vector.load %arg10[%c0_24, %c0_25] : memref<64x128xbf16, #tpu.memory_space<vmem>>, vector<64x128xbf16>
    %cst_26 = arith.constant dense<0.000000e+00> : vector<8x128xf32>
    %35 = tpu.matmul %33, %34, %cst_26 {dimension_numbers = #tpu.dot_dimension_numbers<[1], [0], [0], [1], [0, 0, 1, 1], [], []>} : vector<8x64xbf16>, vector<64x128xbf16>, vector<8x128xf32> -> vector<8x128xf32>
    %c0_27 = arith.constant 0 : index
    %c0_28 = arith.constant 0 : index
    %36 = vector.load %arg11[%c0_27, %c0_28] : memref<1x128xf32, #tpu.memory_space<vmem>>, vector<1x128xf32>
    %37 = vector.broadcast %36 : vector<1x128xf32> to vector<8x128xf32>
    %38 = arith.addf %35, %37 : vector<8x128xf32>
    %cst_29 = arith.constant dense<0xFF800000> : vector<8xf32>
    %39 = vector.multi_reduction <maximumf>, %38, %cst_29 [1] : vector<8x128xf32> to vector<8xf32>
    %40 = vector.shape_cast %39 : vector<8xf32> to vector<8x1xf32>
    %41 = vector.broadcast %40 : vector<8x1xf32> to vector<8x128xf32>
    %42 = arith.subf %38, %41 : vector<8x128xf32>
    %43 = math.exp %42 : vector<8x128xf32>
    %cst_30 = arith.constant dense<0.000000e+00> : vector<8xf32>
    %44 = vector.multi_reduction <add>, %43, %cst_30 [1] : vector<8x128xf32> to vector<8xf32>
    %45 = vector.shape_cast %44 : vector<8xf32> to vector<8x1xf32>
    %46 = math.log %45 : vector<8x1xf32>
    %47 = vector.broadcast %46 : vector<8x1xf32> to vector<8x128xf32>
    %48 = arith.subf %42, %47 : vector<8x128xf32>
    %c0_31 = arith.constant 0 : index
    %c0_32 = arith.constant 0 : index
    %49 = vector.load %arg12[%c0_31, %c0_32] : memref<8x128xf32, #tpu.memory_space<vmem>>, vector<8x128xf32>
    tpu.vector_store %arg12[%c0_31, %c0_32], %48 {strides = array<i32>} : memref<8x128xf32, #tpu.memory_space<vmem>>, vector<8x128xf32>,
    return
  }
  func.func @transform_0(%arg0: i32) -> (i32, i32) {
    %c0_i32 = arith.constant 0 : i32
    %c0_i32_0 = arith.constant 0 : i32
    return %arg0, %c0_i32 : i32, i32
  }
  func.func @transform_1(%arg0: i32) -> (i32, i32) {
    %c0_i32 = arith.constant 0 : i32
    %c0_i32_0 = arith.constant 0 : i32
    %c0_i32_1 = arith.constant 0 : i32
    return %c0_i32, %c0_i32_0 : i32, i32
  }
  func.func @transform_2(%arg0: i32) -> (i32, i32) {
    %c0_i32 = arith.constant 0 : i32
    %c0_i32_0 = arith.constant 0 : i32
    %c0_i32_1 = arith.constant 0 : i32
    return %c0_i32, %c0_i32_0 : i32, i32
  }
  func.func @transform_3(%arg0: i32) -> (i32, i32) {
    %c0_i32 = arith.constant 0 : i32
    %c0_i32_0 = arith.constant 0 : i32
    %c0_i32_1 = arith.constant 0 : i32
    return %c0_i32, %c0_i32_0 : i32, i32
  }
  func.func @transform_4(%arg0: i32) -> (i32, i32) {
    %c0_i32 = arith.constant 0 : i32
    %c0_i32_0 = arith.constant 0 : i32
    %c0_i32_1 = arith.constant 0 : i32
    return %c0_i32, %c0_i32_0 : i32, i32
  }
  func.func @transform_5(%arg0: i32) -> (i32, i32) {
    %c0_i32 = arith.constant 0 : i32
    %c0_i32_0 = arith.constant 0 : i32
    %c0_i32_1 = arith.constant 0 : i32
    return %c0_i32, %c0_i32_0 : i32, i32
  }
  func.func @transform_6(%arg0: i32) -> (i32, i32) {
    %c0_i32 = arith.constant 0 : i32
    %c0_i32_0 = arith.constant 0 : i32
    %c0_i32_1 = arith.constant 0 : i32
    return %c0_i32, %c0_i32_0 : i32, i32
  }
  func.func @transform_7(%arg0: i32) -> (i32, i32) {
    %c0_i32 = arith.constant 0 : i32
    %c0_i32_0 = arith.constant 0 : i32
    %c0_i32_1 = arith.constant 0 : i32
    return %c0_i32, %c0_i32_0 : i32, i32
  }
  func.func @transform_8(%arg0: i32) -> (i32, i32) {
    %c0_i32 = arith.constant 0 : i32
    %c0_i32_0 = arith.constant 0 : i32
    %c0_i32_1 = arith.constant 0 : i32
    return %c0_i32, %c0_i32_0 : i32, i32
  }
  func.func @transform_9(%arg0: i32) -> (i32, i32) {
    %c0_i32 = arith.constant 0 : i32
    %c0_i32_0 = arith.constant 0 : i32
    %c0_i32_1 = arith.constant 0 : i32
    return %c0_i32, %c0_i32_0 : i32, i32
  }
  func.func @transform_10(%arg0: i32) -> (i32, i32) {
    %c0_i32 = arith.constant 0 : i32
    %c0_i32_0 = arith.constant 0 : i32
    %c0_i32_1 = arith.constant 0 : i32
    return %c0_i32, %c0_i32_0 : i32, i32
  }
  func.func @transform_11(%arg0: i32) -> (i32, i32) {
    %c0_i32 = arith.constant 0 : i32
    %c0_i32_0 = arith.constant 0 : i32
    return %arg0, %c0_i32 : i32, i32
  }
}

</mosaic_0001>

<llo_original>
// kernel: net_forward.1
$region0: #{net_forward.1}
  #allocation0 [shape = 'u32[]', space=smem, size = 0x4, offset = 0x4, fixed_abs, tag = 'smem constant byte address 0x4 - core index']
  #allocation1 [shape = 'u32[144,128]{1,0:T(1,128)}', space=vmem, size = 0x12000, scoped, tag = 'internal scratch']
  %s0 = inlined_call_operand.vmem [shape: f32[8,784], index: 0, kind: input, shape index: {}]
  %s1 = inlined_call_operand.vmem [shape: bf16[784,64], index: 1, kind: input, shape index: {}]
  %s2 = inlined_call_operand.vmem [shape: f32[1,64], index: 2, kind: input, shape index: {}]
  %s3 = inlined_call_operand.vmem [shape: bf16[64,64], index: 3, kind: input, shape index: {}]
  %s4 = inlined_call_operand.vmem [shape: f32[1,64], index: 4, kind: input, shape index: {}]
  %s5 = inlined_call_operand.vmem [shape: bf16[64,64], index: 5, kind: input, shape index: {}]
  %s6 = inlined_call_operand.vmem [shape: f32[1,64], index: 6, kind: input, shape index: {}]
  %s7 = inlined_call_operand.vmem [shape: bf16[64,64], index: 7, kind: input, shape index: {}]
  %s8 = inlined_call_operand.vmem [shape: f32[1,64], index: 8, kind: input, shape index: {}]
  %s9 = inlined_call_operand.vmem [shape: bf16[64,128], index: 9, kind: input, shape index: {}]
  %s10 = inlined_call_operand.vmem [shape: f32[1,128], index: 10, kind: input, shape index: {}]
  %s11 = inlined_call_operand.hbm [shape: f32[8,128], index: 11, kind: output, shape index: {}]
  %s12 = sld [smem:[#allocation0]]
  $region54: #{net_forward.1} parent=0
    _
  %s14 = ssub.s32 1, %s12
  %s15 = scalar_select 0, %s14, %s12
  $region1: #{net_forward.1} parent=0
    #allocation2 [shape = 'u8[4096]{0}', space=vmem, size = 0x1000, scoped, tag = 'output window, operand 0, single buffered']
    #allocation3 [shape = 's32[1]{0}', space=sflag, size = 0x4, scoped, tag = 'scoped memory for net_forward.1']
    %16 = vsyncpa [#allocation3], 0
    // Predicated region
    $region2: #{net_forward.1} parent=1 // pred_check
      _
    $region3: #{net_forward.1} parent=1 // pred_check_branch
      %18 = sbr.rel (0) target = $region5
    $region4: #{net_forward.1} parent=1 // pred_region
      _
    $region5: #{net_forward.1} parent=1 // pred_fallthru
      _
    // Predicated region
    $region6: #{net_forward.1} parent=1 // pred_check
      _
    $region7: #{net_forward.1} parent=1 // pred_check_branch
      %20 = sbr.rel (0) target = $region9
    $region8: #{net_forward.1} parent=1 // pred_region
      _
    $region9: #{net_forward.1} parent=1 // pred_fallthru
      _
    // Predicated region
    $region10: #{net_forward.1} parent=1 // pred_check
      _
    $region11: #{net_forward.1} parent=1 // pred_check_branch
      %22 = sbr.rel (0) target = $region13
    $region12: #{net_forward.1} parent=1 // pred_region
      _
    $region13: #{net_forward.1} parent=1 // pred_fallthru
      _
    // Predicated region
    $region14: #{net_forward.1} parent=1 // pred_check
      _
    $region15: #{net_forward.1} parent=1 // pred_check_branch
      %24 = sbr.rel (0) target = $region17
    $region16: #{net_forward.1} parent=1 // pred_region
      _
    $region17: #{net_forward.1} parent=1 // pred_fallthru
      _
    // Predicated region
    $region18: #{net_forward.1} parent=1 // pred_check
      _
    $region19: #{net_forward.1} parent=1 // pred_check_branch
      %26 = sbr.rel (0) target = $region21
    $region20: #{net_forward.1} parent=1 // pred_region
      _
    $region21: #{net_forward.1} parent=1 // pred_fallthru
      _
    // Predicated region
    $region22: #{net_forward.1} parent=1 // pred_check
      _
    $region23: #{net_forward.1} parent=1 // pred_check_branch
      %28 = sbr.rel (0) target = $region25
    $region24: #{net_forward.1} parent=1 // pred_region
      _
    $region25: #{net_forward.1} parent=1 // pred_fallthru
      _
    // Predicated region
    $region26: #{net_forward.1} parent=1 // pred_check
      _
    $region27: #{net_forward.1} parent=1 // pred_check_branch
      %30 = sbr.rel (0) target = $region29
    $region28: #{net_forward.1} parent=1 // pred_region
      _
    $region29: #{net_forward.1} parent=1 // pred_fallthru
      _
    // Predicated region
    $region30: #{net_forward.1} parent=1 // pred_check
      _
    $region31: #{net_forward.1} parent=1 // pred_check_branch
      %32 = sbr.rel (0) target = $region33
    $region32: #{net_forward.1} parent=1 // pred_region
      _
    $region33: #{net_forward.1} parent=1 // pred_fallthru
      _
    // Predicated region
    $region34: #{net_forward.1} parent=1 // pred_check
      _
    $region35: #{net_forward.1} parent=1 // pred_check_branch
      %34 = sbr.rel (0) target = $region37
    $region36: #{net_forward.1} parent=1 // pred_region
      _
    $region37: #{net_forward.1} parent=1 // pred_fallthru
      _
    // Predicated region
    $region38: #{net_forward.1} parent=1 // pred_check
      _
    $region39: #{net_forward.1} parent=1 // pred_check_branch
      %36 = sbr.rel (0) target = $region41
    $region40: #{net_forward.1} parent=1 // pred_region
      _
    $region41: #{net_forward.1} parent=1 // pred_fallthru
      _
    // Predicated region
    $region42: #{net_forward.1} parent=1 // pred_check
      _
    $region43: #{net_forward.1} parent=1 // pred_check_branch
      %38 = sbr.rel (0) target = $region45
    $region44: #{net_forward.1} parent=1 // pred_region
      _
    $region45: #{net_forward.1} parent=1 // pred_fallthru
      _
    %v40 = vld [vmem:[%s0] sm:$0xff]
    %v41 = vld [vmem:[%s0 + $0x8] sm:$0xff]
    %v42 = vld [vmem:[%s0 + $0x10] sm:$0xff]
    %v43 = vld [vmem:[%s0 + $0x18] sm:$0xff]
    %v44 = vld [vmem:[%s0 + $0x20] sm:$0xff]
    %v45 = vld [vmem:[%s0 + $0x28] sm:$0xff]
    %v46 = vld [vmem:[%s0 + $0x30] sm:$0xff]
    %v47 = vpack.c.bf16 %v40, %v40
    %v48 = vpack.c.bf16 %v41, %v41
    %v49 = vpack.c.bf16 %v42, %v42
    %v50 = vpack.c.bf16 %v43, %v43
    %v51 = vpack.c.bf16 %v44, %v44
    %v52 = vpack.c.bf16 %v45, %v45
    %v53 = vpack.c.bf16 %v46, %v46
    %v54 = vld [vmem:[%s1] sm:$0xf]
    %v55 = vld [vmem:[%s1 + $0x4] sm:$0xf]
    %v56 = vld [vmem:[%s1 + $0x8] sm:$0xf]
    %v57 = vld [vmem:[%s1 + $0xc] sm:$0xf]
    %v58 = vld [vmem:[%s1 + $0x10] sm:$0xf]
    %v59 = vld [vmem:[%s1 + $0x14] sm:$0xf]
    %v60 = vld [vmem:[%s1 + $0x18] sm:$0xf]
    %v61 = vld [vmem:[%s1 + $0x1c] sm:$0xf]
    %v62 = vld [vmem:[%s1 + $0x20] sm:$0xf]
    %v63 = vld [vmem:[%s1 + $0x24] sm:$0xf]
    %v64 = vld [vmem:[%s1 + $0x28] sm:$0xf]
    %v65 = vld [vmem:[%s1 + $0x2c] sm:$0xf]
    %v66 = vld [vmem:[%s1 + $0x30] sm:$0xf]
    %v67 = vld [vmem:[%s1 + $0x34] sm:$0xf]
    %v68 = vld [vmem:[%s1 + $0x38] sm:$0xf]
    %v69 = vld [vmem:[%s1 + $0x3c] sm:$0xf]
    %v70 = vld [vmem:[%s1 + $0x40] sm:$0xf]
    %v71 = vld [vmem:[%s1 + $0x44] sm:$0xf]
    %v72 = vld [vmem:[%s1 + $0x48] sm:$0xf]
    %v73 = vld [vmem:[%s1 + $0x4c] sm:$0xf]
    %v74 = vld [vmem:[%s1 + $0x50] sm:$0xf]
    %v75 = vld [vmem:[%s1 + $0x54] sm:$0xf]
    %v76 = vld [vmem:[%s1 + $0x58] sm:$0xf]
    %v77 = vld [vmem:[%s1 + $0x5c] sm:$0xf]
    %v78 = vld [vmem:[%s1 + $0x60] sm:$0xf]
    %v79 = vld [vmem:[%s1 + $0x64] sm:$0xf]
    %v80 = vld [vmem:[%s1 + $0x68] sm:$0xf]
    %v81 = vld [vmem:[%s1 + $0x6c] sm:$0xf]
    %v82 = vld [vmem:[%s1 + $0x70] sm:$0xf]
    %v83 = vld [vmem:[%s1 + $0x74] sm:$0xf]
    %v84 = vld [vmem:[%s1 + $0x78] sm:$0xf]
    %v85 = vld [vmem:[%s1 + $0x7c] sm:$0xf]
    %v86 = vld [vmem:[%s1 + $0x80] sm:$0xf]
    %v87 = vld [vmem:[%s1 + $0x84] sm:$0xf]
    %v88 = vld [vmem:[%s1 + $0x88] sm:$0xf]
    %v89 = vld [vmem:[%s1 + $0x8c] sm:$0xf]
    %v90 = vld [vmem:[%s1 + $0x90] sm:$0xf]
    %v91 = vld [vmem:[%s1 + $0x94] sm:$0xf]
    %v92 = vld [vmem:[%s1 + $0x98] sm:$0xf]
    %v93 = vld [vmem:[%s1 + $0x9c] sm:$0xf]
    %v94 = vld [vmem:[%s1 + $0xa0] sm:$0xf]
    %v95 = vld [vmem:[%s1 + $0xa4] sm:$0xf]
    %v96 = vld [vmem:[%s1 + $0xa8] sm:$0xf]
    %v97 = vld [vmem:[%s1 + $0xac] sm:$0xf]
    %v98 = vld [vmem:[%s1 + $0xb0] sm:$0xf]
    %v99 = vld [vmem:[%s1 + $0xb4] sm:$0xf]
    %v100 = vld [vmem:[%s1 + $0xb8] sm:$0xf]
    %v101 = vld [vmem:[%s1 + $0xbc] sm:$0xf]
    %v102 = vld [vmem:[%s1 + $0xc0] sm:$0xf]
    %v103 = vld [vmem:[%s1 + $0xc4] sm:$0xf]
    %v104 = vld [vmem:[%s1 + $0xc8] sm:$0xf]
    %v105 = vld [vmem:[%s1 + $0xcc] sm:$0xf]
    %v106 = vld [vmem:[%s1 + $0xd0] sm:$0xf]
    %v107 = vld [vmem:[%s1 + $0xd4] sm:$0xf]
    %v108 = vld [vmem:[%s1 + $0xd8] sm:$0xf]
    %v109 = vld [vmem:[%s1 + $0xdc] sm:$0xf]
    %v110 = vld [vmem:[%s1 + $0xe0] sm:$0xf]
    %v111 = vld [vmem:[%s1 + $0xe4] sm:$0xf]
    %v112 = vld [vmem:[%s1 + $0xe8] sm:$0xf]
    %v113 = vld [vmem:[%s1 + $0xec] sm:$0xf]
    %v114 = vld [vmem:[%s1 + $0xf0] sm:$0xf]
    %v115 = vld [vmem:[%s1 + $0xf4] sm:$0xf]
    %v116 = vld [vmem:[%s1 + $0xf8] sm:$0xf]
    %v117 = vld [vmem:[%s1 + $0xfc] sm:$0xf]
    %v118 = vld [vmem:[%s1 + $0x100] sm:$0xf]
    %v119 = vld [vmem:[%s1 + $0x104] sm:$0xf]
    %v120 = vld [vmem:[%s1 + $0x108] sm:$0xf]
    %v121 = vld [vmem:[%s1 + $0x10c] sm:$0xf]
    %v122 = vld [vmem:[%s1 + $0x110] sm:$0xf]
    %v123 = vld [vmem:[%s1 + $0x114] sm:$0xf]
    %v124 = vld [vmem:[%s1 + $0x118] sm:$0xf]
    %v125 = vld [vmem:[%s1 + $0x11c] sm:$0xf]
    %v126 = vld [vmem:[%s1 + $0x120] sm:$0xf]
    %v127 = vld [vmem:[%s1 + $0x124] sm:$0xf]
    %v128 = vld [vmem:[%s1 + $0x128] sm:$0xf]
    %v129 = vld [vmem:[%s1 + $0x12c] sm:$0xf]
    %v130 = vld [vmem:[%s1 + $0x130] sm:$0xf]
    %v131 = vld [vmem:[%s1 + $0x134] sm:$0xf]
    %v132 = vld [vmem:[%s1 + $0x138] sm:$0xf]
    %v133 = vld [vmem:[%s1 + $0x13c] sm:$0xf]
    %v134 = vld [vmem:[%s1 + $0x140] sm:$0xf]
    %v135 = vld [vmem:[%s1 + $0x144] sm:$0xf]
    %v136 = vld [vmem:[%s1 + $0x148] sm:$0xf]
    %v137 = vld [vmem:[%s1 + $0x14c] sm:$0xf]
    %v138 = vld [vmem:[%s1 + $0x150] sm:$0xf]
    %v139 = vld [vmem:[%s1 + $0x154] sm:$0xf]
    %v140 = vld [vmem:[%s1 + $0x158] sm:$0xf]
    %v141 = vld [vmem:[%s1 + $0x15c] sm:$0xf]
    %v142 = vld [vmem:[%s1 + $0x160] sm:$0xf]
    %v143 = vld [vmem:[%s1 + $0x164] sm:$0xf]
    %v144 = vld [vmem:[%s1 + $0x168] sm:$0xf]
    %v145 = vld [vmem:[%s1 + $0x16c] sm:$0xf]
    %v146 = vld [vmem:[%s1 + $0x170] sm:$0xf]
    %v147 = vld [vmem:[%s1 + $0x174] sm:$0xf]
    %v148 = vld [vmem:[%s1 + $0x178] sm:$0xf]
    %v149 = vld [vmem:[%s1 + $0x17c] sm:$0xf]
    %v150 = vld [vmem:[%s1 + $0x180] sm:$0xf]
    %v151 = vld [vmem:[%s1 + $0x184] sm:$0xf]
    %v152 = vld [vmem:[%s2] sm:$0x1]
    %v154 = vlaneseq
    %v155 = vshrl.u32 %v154, 7
    %v156 = vsub.s32 0, %v155
    %v157 = vrot.slane %v152, %v156
    %v257 = vunpack.c.l.b16 %v54
    %v258 = vunpack.c.l.b16 %v55
    %v259 = vunpack.c.l.b16 %v56
    %v260 = vunpack.c.l.b16 %v57
    %v261 = vunpack.c.l.b16 %v58
    %v262 = vunpack.c.l.b16 %v59
    %v263 = vunpack.c.l.b16 %v60
    %v264 = vunpack.c.l.b16 %v61
    %v265 = vunpack.c.l.b16 %v62
    %v266 = vunpack.c.l.b16 %v63
    %v267 = vunpack.c.l.b16 %v64
    %v268 = vunpack.c.l.b16 %v65
    %v269 = vunpack.c.l.b16 %v66
    %v270 = vunpack.c.l.b16 %v67
    %v271 = vunpack.c.l.b16 %v68
    %v272 = vunpack.c.l.b16 %v69
    %v273 = vunpack.c.l.b16 %v70
    %v274 = vunpack.c.l.b16 %v71
    %v275 = vunpack.c.l.b16 %v72
    %v276 = vunpack.c.l.b16 %v73
    %v277 = vunpack.c.l.b16 %v74
    %v278 = vunpack.c.l.b16 %v75
    %v279 = vunpack.c.l.b16 %v76
    %v280 = vunpack.c.l.b16 %v77
    %v281 = vunpack.c.l.b16 %v78
    %v282 = vunpack.c.l.b16 %v79
    %v283 = vunpack.c.l.b16 %v80
    %v284 = vunpack.c.l.b16 %v81
    %v285 = vunpack.c.l.b16 %v82
    %v286 = vunpack.c.l.b16 %v83
    %v287 = vunpack.c.l.b16 %v84
    %v288 = vunpack.c.l.b16 %v85
    %v289 = vunpack.c.l.b16 %v86
    %v290 = vunpack.c.l.b16 %v87
    %v291 = vunpack.c.l.b16 %v88
    %v292 = vunpack.c.l.b16 %v89
    %v293 = vunpack.c.l.b16 %v90
    %v294 = vunpack.c.l.b16 %v91
    %v295 = vunpack.c.l.b16 %v92
    %v296 = vunpack.c.l.b16 %v93
    %v297 = vunpack.c.l.b16 %v94
    %v298 = vunpack.c.l.b16 %v95
    %v299 = vunpack.c.l.b16 %v96
    %v300 = vunpack.c.l.b16 %v97
    %v301 = vunpack.c.l.b16 %v98
    %v302 = vunpack.c.l.b16 %v99
    %v303 = vunpack.c.l.b16 %v100
    %v304 = vunpack.c.l.b16 %v101
    %v305 = vunpack.c.l.b16 %v102
    %v306 = vunpack.c.l.b16 %v103
    %v307 = vunpack.c.l.b16 %v104
    %v308 = vunpack.c.l.b16 %v105
    %v309 = vunpack.c.l.b16 %v106
    %v310 = vunpack.c.l.b16 %v107
    %v311 = vunpack.c.l.b16 %v108
    %v312 = vunpack.c.l.b16 %v109
    %v313 = vunpack.c.l.b16 %v110
    %v314 = vunpack.c.l.b16 %v111
    %v315 = vunpack.c.l.b16 %v112
    %v316 = vunpack.c.l.b16 %v113
    %v317 = vunpack.c.l.b16 %v114
    %v318 = vunpack.c.l.b16 %v115
    %v319 = vunpack.c.l.b16 %v116
    %v320 = vunpack.c.l.b16 %v117
    %v321 = vunpack.c.l.b16 %v118
    %v322 = vunpack.c.l.b16 %v119
    %v323 = vunpack.c.l.b16 %v120
    %v324 = vunpack.c.l.b16 %v121
    %v325 = vunpack.c.l.b16 %v122
    %v326 = vunpack.c.l.b16 %v123
    %v327 = vunpack.c.l.b16 %v124
    %v328 = vunpack.c.l.b16 %v125
    %v329 = vunpack.c.l.b16 %v126
    %v330 = vunpack.c.l.b16 %v127
    %v331 = vunpack.c.l.b16 %v128
    %v332 = vunpack.c.l.b16 %v129
    %v333 = vunpack.c.l.b16 %v130
    %v334 = vunpack.c.l.b16 %v131
    %v335 = vunpack.c.l.b16 %v132
    %v336 = vunpack.c.l.b16 %v133
    %v337 = vunpack.c.l.b16 %v134
    %v338 = vunpack.c.l.b16 %v135
    %v339 = vunpack.c.l.b16 %v136
    %v340 = vunpack.c.l.b16 %v137
    %v341 = vunpack.c.l.b16 %v138
    %v342 = vunpack.c.l.b16 %v139
    %v343 = vunpack.c.l.b16 %v140
    %v344 = vunpack.c.l.b16 %v141
    %v345 = vunpack.c.l.b16 %v142
    %v346 = vunpack.c.l.b16 %v143
    %v347 = vunpack.c.l.b16 %v144
    %v348 = vunpack.c.l.b16 %v145
    %v349 = vunpack.c.l.b16 %v146
    %v350 = vunpack.c.l.b16 %v147
    %v351 = vunpack.c.l.b16 %v148
    %v352 = vunpack.c.l.b16 %v149
    %v353 = vunpack.c.l.b16 %v150
    %v354 = vunpack.c.l.b16 %v151
    %v355 = vpack.c.b16 %v258, %v257
    %v356 = vpack.c.b16 %v260, %v259
    %v357 = vpack.c.b16 %v262, %v261
    %v358 = vpack.c.b16 %v264, %v263
    %v359 = vpack.c.b16 %v266, %v265
    %v360 = vpack.c.b16 %v268, %v267
    %v361 = vpack.c.b16 %v270, %v269
    %v362 = vpack.c.b16 %v272, %v271
    %v363 = vpack.c.b16 %v274, %v273
    %v364 = vpack.c.b16 %v276, %v275
    %v365 = vpack.c.b16 %v278, %v277
    %v366 = vpack.c.b16 %v280, %v279
    %v367 = vpack.c.b16 %v282, %v281
    %v368 = vpack.c.b16 %v284, %v283
    %v369 = vpack.c.b16 %v286, %v285
    %v370 = vpack.c.b16 %v288, %v287
    %v371 = vpack.c.b16 %v290, %v289
    %v372 = vpack.c.b16 %v292, %v291
    %v373 = vpack.c.b16 %v294, %v293
    %v374 = vpack.c.b16 %v296, %v295
    %v375 = vpack.c.b16 %v298, %v297
    %v376 = vpack.c.b16 %v300, %v299
    %v377 = vpack.c.b16 %v302, %v301
    %v378 = vpack.c.b16 %v304, %v303
    %v379 = vpack.c.b16 %v306, %v305
    %v380 = vpack.c.b16 %v308, %v307
    %v381 = vpack.c.b16 %v310, %v309
    %v382 = vpack.c.b16 %v312, %v311
    %v383 = vpack.c.b16 %v314, %v313
    %v384 = vpack.c.b16 %v316, %v315
    %v385 = vpack.c.b16 %v318, %v317
    %v386 = vpack.c.b16 %v320, %v319
    %v387 = vpack.c.b16 %v322, %v321
    %v388 = vpack.c.b16 %v324, %v323
    %v389 = vpack.c.b16 %v326, %v325
    %v390 = vpack.c.b16 %v328, %v327
    %v391 = vpack.c.b16 %v330, %v329
    %v392 = vpack.c.b16 %v332, %v331
    %v393 = vpack.c.b16 %v334, %v333
    %v394 = vpack.c.b16 %v336, %v335
    %v395 = vpack.c.b16 %v338, %v337
    %v396 = vpack.c.b16 %v340, %v339
    %v397 = vpack.c.b16 %v342, %v341
    %v398 = vpack.c.b16 %v344, %v343
    %v399 = vpack.c.b16 %v346, %v345
    %v400 = vpack.c.b16 %v348, %v347
    %v401 = vpack.c.b16 %v350, %v349
    %v402 = vpack.c.b16 %v352, %v351
    %v403 = vpack.c.b16 %v354, %v353
    %vm453 = vcmask 130048
    %v455 = vsel %vm453, %v53, 0
    %457 = vmatprep.subr.bf16.mxu0 0
    %458 = vmatpush1.bf16.msra.mxu0 %v355
    %459 = vmatprep.subr.bf16.mxu0 0
    %460 = vmatpush1.bf16.msra.mxu0 %v356
    %461 = vmatprep.subr.bf16.mxu0 0
    %462 = vmatpush1.bf16.msra.mxu0 %v357
    %463 = vmatprep.subr.bf16.mxu0 0
    %464 = vmatpush1.bf16.msra.mxu0 %v358
    %465 = vmatprep.subr.bf16.mxu0 0
    %466 = vmatpush1.bf16.msra.mxu0 %v359
    %467 = vmatprep.subr.bf16.mxu0 0
    %468 = vmatpush1.bf16.msra.mxu0 %v360
    %469 = vmatprep.subr.bf16.mxu0 0
    %470 = vmatpush1.bf16.msra.mxu0 %v361
    %471 = vmatprep.subr.bf16.mxu0 0
    %472 = vmatpush1.bf16.msra.mxu0 %v362
    %473 = vmatprep.subr.bf16.mxu0 0
    %474 = vmatpush1.bf16.msra.mxu0 %v363
    %475 = vmatprep.subr.bf16.mxu0 0
    %476 = vmatpush1.bf16.msra.mxu0 %v364
    %477 = vmatprep.subr.bf16.mxu0 0
    %478 = vmatpush1.bf16.msra.mxu0 %v365
    %479 = vmatprep.subr.bf16.mxu0 0
    %480 = vmatpush1.bf16.msra.mxu0 %v366
    %481 = vmatprep.subr.bf16.mxu0 0
    %482 = vmatpush1.bf16.msra.mxu0 %v367
    %483 = vmatprep.subr.bf16.mxu0 0
    %484 = vmatpush1.bf16.msra.mxu0 %v368
    %485 = vmatprep.subr.bf16.mxu0 0
    %486 = vmatpush1.bf16.msra.mxu0 %v369
    %487 = vmatprep.subr.bf16.mxu0 0
    %488 = vmatpush1.bf16.msra.mxu0 %v370
    %489 = vmatprep.mubr.bf16.mxu0 %v48
    %490 = vmatmul.mubr.bf16.gmra.mrb[0].mxu0 %v47
    %v491 = vpop.f32.mrb[0].mxu0
    %v492 = vadd.f32 %v157, %v491
    %v493 = vpop.f32.mrb[0].mxu0
    %v494 = vpop.f32.mrb[0].mxu0
    %v495 = vpop.f32.mrb[0].mxu0
    %496 = vdwg.mxu0
    %497 = vmatprep.subr.bf16.mxu0 0
    %498 = vmatpush1.bf16.msra.mxu0 %v371
    %499 = vmatprep.subr.bf16.mxu0 0
    %500 = vmatpush1.bf16.msra.mxu0 %v372
    %501 = vmatprep.subr.bf16.mxu0 0
    %502 = vmatpush1.bf16.msra.mxu0 %v373
    %503 = vmatprep.subr.bf16.mxu0 0
    %504 = vmatpush1.bf16.msra.mxu0 %v374
    %505 = vmatprep.subr.bf16.mxu0 0
    %506 = vmatpush1.bf16.msra.mxu0 %v375
    %507 = vmatprep.subr.bf16.mxu0 0
    %508 = vmatpush1.bf16.msra.mxu0 %v376
    %509 = vmatprep.subr.bf16.mxu0 0
    %510 = vmatpush1.bf16.msra.mxu0 %v377
    %511 = vmatprep.subr.bf16.mxu0 0
    %512 = vmatpush1.bf16.msra.mxu0 %v378
    %513 = vmatprep.subr.bf16.mxu0 0
    %514 = vmatpush1.bf16.msra.mxu0 %v379
    %515 = vmatprep.subr.bf16.mxu0 0
    %516 = vmatpush1.bf16.msra.mxu0 %v380
    %517 = vmatprep.subr.bf16.mxu0 0
    %518 = vmatpush1.bf16.msra.mxu0 %v381
    %519 = vmatprep.subr.bf16.mxu0 0
    %520 = vmatpush1.bf16.msra.mxu0 %v382
    %521 = vmatprep.subr.bf16.mxu0 0
    %522 = vmatpush1.bf16.msra.mxu0 %v383
    %523 = vmatprep.subr.bf16.mxu0 0
    %524 = vmatpush1.bf16.msra.mxu0 %v384
    %525 = vmatprep.subr.bf16.mxu0 0
    %526 = vmatpush1.bf16.msra.mxu0 %v385
    %527 = vmatprep.subr.bf16.mxu0 0
    %528 = vmatpush1.bf16.msra.mxu0 %v386
    %529 = vmatprep.mubr.bf16.mxu0 %v50
    %530 = vmatmul.mubr.bf16.gmra.mrb[0].mxu0 %v49
    %v531 = vpop.f32.mrb[0].mxu0
    %v532 = vadd.f32 %v492, %v531
    %v533 = vpop.f32.mrb[0].mxu0
    %v534 = vpop.f32.mrb[0].mxu0
    %v535 = vpop.f32.mrb[0].mxu0
    %536 = vdwg.mxu0
    %537 = vmatprep.subr.bf16.mxu0 0
    %538 = vmatpush1.bf16.msra.mxu0 %v387
    %539 = vmatprep.subr.bf16.mxu0 0
    %540 = vmatpush1.bf16.msra.mxu0 %v388
    %541 = vmatprep.subr.bf16.mxu0 0
    %542 = vmatpush1.bf16.msra.mxu0 %v389
    %543 = vmatprep.subr.bf16.mxu0 0
    %544 = vmatpush1.bf16.msra.mxu0 %v390
    %545 = vmatprep.subr.bf16.mxu0 0
    %546 = vmatpush1.bf16.msra.mxu0 %v391
    %547 = vmatprep.subr.bf16.mxu0 0
    %548 = vmatpush1.bf16.msra.mxu0 %v392
    %549 = vmatprep.subr.bf16.mxu0 0
    %550 = vmatpush1.bf16.msra.mxu0 %v393
    %551 = vmatprep.subr.bf16.mxu0 0
    %552 = vmatpush1.bf16.msra.mxu0 %v394
    %553 = vmatprep.subr.bf16.mxu0 0
    %554 = vmatpush1.bf16.msra.mxu0 %v395
    %555 = vmatprep.subr.bf16.mxu0 0
    %556 = vmatpush1.bf16.msra.mxu0 %v396
    %557 = vmatprep.subr.bf16.mxu0 0
    %558 = vmatpush1.bf16.msra.mxu0 %v397
    %559 = vmatprep.subr.bf16.mxu0 0
    %560 = vmatpush1.bf16.msra.mxu0 %v398
    %561 = vmatprep.subr.bf16.mxu0 0
    %562 = vmatpush1.bf16.msra.mxu0 %v399
    %563 = vmatprep.subr.bf16.mxu0 0
    %564 = vmatpush1.bf16.msra.mxu0 %v400
    %565 = vmatprep.subr.bf16.mxu0 0
    %566 = vmatpush1.bf16.msra.mxu0 %v401
    %567 = vmatprep.subr.bf16.mxu0 0
    %568 = vmatpush1.bf16.msra.mxu0 %v402
    %569 = vmatprep.mubr.bf16.mxu0 %v52
    %570 = vmatmul.mubr.bf16.gmra.mrb[0].mxu0 %v51
    %v571 = vpop.f32.mrb[0].mxu0
    %v572 = vadd.f32 %v532, %v571
    %v573 = vpop.f32.mrb[0].mxu0
    %v574 = vpop.f32.mrb[0].mxu0
    %v575 = vpop.f32.mrb[0].mxu0
    %576 = vdwg.mxu0
    %577 = vmatprep.subr.bf16.mxu0 0
    %578 = vmatpush1.bf16.msra.mxu0 %v403
    %579 = vmatprep.subr.bf16.mxu0 0
    %580 = vmatpush1.bf16.msra.mxu0 0
    %581 = vmatprep.subr.bf16.mxu0 0
    %582 = vmatpush1.bf16.msra.mxu0 0
    %583 = vmatprep.subr.bf16.mxu0 0
    %584 = vmatpush1.bf16.msra.mxu0 0
    %585 = vmatprep.subr.bf16.mxu0 0
    %586 = vmatpush1.bf16.msra.mxu0 0
    %587 = vmatprep.subr.bf16.mxu0 0
    %588 = vmatpush1.bf16.msra.mxu0 0
    %589 = vmatprep.subr.bf16.mxu0 0
    %590 = vmatpush1.bf16.msra.mxu0 0
    %591 = vmatprep.subr.bf16.mxu0 0
    %592 = vmatpush1.bf16.msra.mxu0 0
    %593 = vmatprep.subr.bf16.mxu0 0
    %594 = vmatpush1.bf16.msra.mxu0 0
    %595 = vmatprep.subr.bf16.mxu0 0
    %596 = vmatpush1.bf16.msra.mxu0 0
    %597 = vmatprep.subr.bf16.mxu0 0
    %598 = vmatpush1.bf16.msra.mxu0 0
    %599 = vmatprep.subr.bf16.mxu0 0
    %600 = vmatpush1.bf16.msra.mxu0 0
    %601 = vmatprep.subr.bf16.mxu0 0
    %602 = vmatpush1.bf16.msra.mxu0 0
    %603 = vmatprep.subr.bf16.mxu0 0
    %604 = vmatpush1.bf16.msra.mxu0 0
    %605 = vmatprep.subr.bf16.mxu0 0
    %606 = vmatpush1.bf16.msra.mxu0 0
    %607 = vmatprep.subr.bf16.mxu0 0
    %608 = vmatpush1.bf16.msra.mxu0 0
    %609 = vmatprep.mubr.bf16.mxu0 0
    %610 = vmatmul.mubr.bf16.gmra.mrb[0].mxu0 %v455
    %v611 = vpop.f32.mrb[0].mxu0
    %v612 = vadd.f32 %v572, %v611
    %v613 = vpop.f32.mrb[0].mxu0
    %v614 = vpop.f32.mrb[0].mxu0
    %v615 = vpop.f32.mrb[0].mxu0
    %616 = vdwg.mxu0
    %v617 = vmax.f32 %v612, 0.0
    %v618 = vpack.c.bf16 %v617, %v617
    %v619 = vld [vmem:[%s3] sm:$0xf]
    %v620 = vld [vmem:[%s3 + $0x4] sm:$0xf]
    %v621 = vld [vmem:[%s3 + $0x8] sm:$0xf]
    %v622 = vld [vmem:[%s3 + $0xc] sm:$0xf]
    %v623 = vld [vmem:[%s3 + $0x10] sm:$0xf]
    %v624 = vld [vmem:[%s3 + $0x14] sm:$0xf]
    %v625 = vld [vmem:[%s3 + $0x18] sm:$0xf]
    %v626 = vld [vmem:[%s3 + $0x1c] sm:$0xf]
    %v627 = vld [vmem:[%s4] sm:$0x1]
    %v629 = vlaneseq
    %v630 = vshrl.u32 %v629, 7
    %v631 = vsub.s32 0, %v630
    %v632 = vrot.slane %v627, %v631
    %v642 = vunpack.c.l.b16 %v619
    %v643 = vunpack.c.l.b16 %v620
    %v644 = vunpack.c.l.b16 %v621
    %v645 = vunpack.c.l.b16 %v622
    %v646 = vunpack.c.l.b16 %v623
    %v647 = vunpack.c.l.b16 %v624
    %v648 = vunpack.c.l.b16 %v625
    %v649 = vunpack.c.l.b16 %v626
    %v650 = vpack.c.b16 %v643, %v642
    %v651 = vpack.c.b16 %v645, %v644
    %v652 = vpack.c.b16 %v647, %v646
    %v653 = vpack.c.b16 %v649, %v648
    %vm658 = vcmask 523264
    %v660 = vsel %vm658, %v618, 0
    %662 = vmatprep.subr.bf16.mxu0 0
    %663 = vmatpush1.bf16.msra.mxu0 %v650
    %664 = vmatprep.subr.bf16.mxu0 0
    %665 = vmatpush1.bf16.msra.mxu0 %v651
    %666 = vmatprep.subr.bf16.mxu0 0
    %667 = vmatpush1.bf16.msra.mxu0 %v652
    %668 = vmatprep.subr.bf16.mxu0 0
    %669 = vmatpush1.bf16.msra.mxu0 %v653
    %670 = vmatprep.subr.bf16.mxu0 0
    %671 = vmatpush1.bf16.msra.mxu0 0
    %672 = vmatprep.subr.bf16.mxu0 0
    %673 = vmatpush1.bf16.msra.mxu0 0
    %674 = vmatprep.subr.bf16.mxu0 0
    %675 = vmatpush1.bf16.msra.mxu0 0
    %676 = vmatprep.subr.bf16.mxu0 0
    %677 = vmatpush1.bf16.msra.mxu0 0
    %678 = vmatprep.subr.bf16.mxu0 0
    %679 = vmatpush1.bf16.msra.mxu0 0
    %680 = vmatprep.subr.bf16.mxu0 0
    %681 = vmatpush1.bf16.msra.mxu0 0
    %682 = vmatprep.subr.bf16.mxu0 0
    %683 = vmatpush1.bf16.msra.mxu0 0
    %684 = vmatprep.subr.bf16.mxu0 0
    %685 = vmatpush1.bf16.msra.mxu0 0
    %686 = vmatprep.subr.bf16.mxu0 0
    %687 = vmatpush1.bf16.msra.mxu0 0
    %688 = vmatprep.subr.bf16.mxu0 0
    %689 = vmatpush1.bf16.msra.mxu0 0
    %690 = vmatprep.subr.bf16.mxu0 0
    %691 = vmatpush1.bf16.msra.mxu0 0
    %692 = vmatprep.subr.bf16.mxu0 0
    %693 = vmatpush1.bf16.msra.mxu0 0
    %694 = vmatprep.mubr.bf16.mxu0 0
    %695 = vmatmul.mubr.bf16.gmra.mrb[0].mxu0 %v660
    %v696 = vpop.f32.mrb[0].mxu0
    %v697 = vadd.f32 %v632, %v696
    %v698 = vpop.f32.mrb[0].mxu0
    %v699 = vpop.f32.mrb[0].mxu0
    %v700 = vpop.f32.mrb[0].mxu0
    %701 = vdwg.mxu0
    %v702 = vmax.f32 %v697, 0.0
    %v703 = vpack.c.bf16 %v702, %v702
    %v704 = vld [vmem:[%s5] sm:$0xf]
    %v705 = vld [vmem:[%s5 + $0x4] sm:$0xf]
    %v706 = vld [vmem:[%s5 + $0x8] sm:$0xf]
    %v707 = vld [vmem:[%s5 + $0xc] sm:$0xf]
    %v708 = vld [vmem:[%s5 + $0x10] sm:$0xf]
    %v709 = vld [vmem:[%s5 + $0x14] sm:$0xf]
    %v710 = vld [vmem:[%s5 + $0x18] sm:$0xf]
    %v711 = vld [vmem:[%s5 + $0x1c] sm:$0xf]
    %v712 = vld [vmem:[%s6] sm:$0x1]
    %v714 = vlaneseq
    %v715 = vshrl.u32 %v714, 7
    %v716 = vsub.s32 0, %v715
    %v717 = vrot.slane %v712, %v716
    %v727 = vunpack.c.l.b16 %v704
    %v728 = vunpack.c.l.b16 %v705
    %v729 = vunpack.c.l.b16 %v706
    %v730 = vunpack.c.l.b16 %v707
    %v731 = vunpack.c.l.b16 %v708
    %v732 = vunpack.c.l.b16 %v709
    %v733 = vunpack.c.l.b16 %v710
    %v734 = vunpack.c.l.b16 %v711
    %v735 = vpack.c.b16 %v728, %v727
    %v736 = vpack.c.b16 %v730, %v729
    %v737 = vpack.c.b16 %v732, %v731
    %v738 = vpack.c.b16 %v734, %v733
    %v744 = vsel %vm658, %v703, 0
    %746 = vmatprep.subr.bf16.mxu0 0
    %747 = vmatpush1.bf16.msra.mxu0 %v735
    %748 = vmatprep.subr.bf16.mxu0 0
    %749 = vmatpush1.bf16.msra.mxu0 %v736
    %750 = vmatprep.subr.bf16.mxu0 0
    %751 = vmatpush1.bf16.msra.mxu0 %v737
    %752 = vmatprep.subr.bf16.mxu0 0
    %753 = vmatpush1.bf16.msra.mxu0 %v738
    %754 = vmatprep.subr.bf16.mxu0 0
    %755 = vmatpush1.bf16.msra.mxu0 0
    %756 = vmatprep.subr.bf16.mxu0 0
    %757 = vmatpush1.bf16.msra.mxu0 0
    %758 = vmatprep.subr.bf16.mxu0 0
    %759 = vmatpush1.bf16.msra.mxu0 0
    %760 = vmatprep.subr.bf16.mxu0 0
    %761 = vmatpush1.bf16.msra.mxu0 0
    %762 = vmatprep.subr.bf16.mxu0 0
    %763 = vmatpush1.bf16.msra.mxu0 0
    %764 = vmatprep.subr.bf16.mxu0 0
    %765 = vmatpush1.bf16.msra.mxu0 0
    %766 = vmatprep.subr.bf16.mxu0 0
    %767 = vmatpush1.bf16.msra.mxu0 0
    %768 = vmatprep.subr.bf16.mxu0 0
    %769 = vmatpush1.bf16.msra.mxu0 0
    %770 = vmatprep.subr.bf16.mxu0 0
    %771 = vmatpush1.bf16.msra.mxu0 0
    %772 = vmatprep.subr.bf16.mxu0 0
    %773 = vmatpush1.bf16.msra.mxu0 0
    %774 = vmatprep.subr.bf16.mxu0 0
    %775 = vmatpush1.bf16.msra.mxu0 0
    %776 = vmatprep.subr.bf16.mxu0 0
    %777 = vmatpush1.bf16.msra.mxu0 0
    %778 = vmatprep.mubr.bf16.mxu0 0
    %779 = vmatmul.mubr.bf16.gmra.mrb[0].mxu0 %v744
    %v780 = vpop.f32.mrb[0].mxu0
    %v781 = vadd.f32 %v717, %v780
    %v782 = vpop.f32.mrb[0].mxu0
    %v783 = vpop.f32.mrb[0].mxu0
    %v784 = vpop.f32.mrb[0].mxu0
    %785 = vdwg.mxu0
    %v786 = vmax.f32 %v781, 0.0
    %v787 = vpack.c.bf16 %v786, %v786
    %v788 = vld [vmem:[%s7] sm:$0xf]
    %v789 = vld [vmem:[%s7 + $0x4] sm:$0xf]
    %v790 = vld [vmem:[%s7 + $0x8] sm:$0xf]
    %v791 = vld [vmem:[%s7 + $0xc] sm:$0xf]
    %v792 = vld [vmem:[%s7 + $0x10] sm:$0xf]
    %v793 = vld [vmem:[%s7 + $0x14] sm:$0xf]
    %v794 = vld [vmem:[%s7 + $0x18] sm:$0xf]
    %v795 = vld [vmem:[%s7 + $0x1c] sm:$0xf]
    %v796 = vld [vmem:[%s8] sm:$0x1]
    %v798 = vlaneseq
    %v799 = vshrl.u32 %v798, 7
    %v800 = vsub.s32 0, %v799
    %v801 = vrot.slane %v796, %v800
    %v811 = vunpack.c.l.b16 %v788
    %v812 = vunpack.c.l.b16 %v789
    %v813 = vunpack.c.l.b16 %v790
    %v814 = vunpack.c.l.b16 %v791
    %v815 = vunpack.c.l.b16 %v792
    %v816 = vunpack.c.l.b16 %v793
    %v817 = vunpack.c.l.b16 %v794
    %v818 = vunpack.c.l.b16 %v795
    %v819 = vpack.c.b16 %v812, %v811
    %v820 = vpack.c.b16 %v814, %v813
    %v821 = vpack.c.b16 %v816, %v815
    %v822 = vpack.c.b16 %v818, %v817
    %v828 = vsel %vm658, %v787, 0
    %830 = vmatprep.subr.bf16.mxu0 0
    %831 = vmatpush1.bf16.msra.mxu0 %v819
    %832 = vmatprep.subr.bf16.mxu0 0
    %833 = vmatpush1.bf16.msra.mxu0 %v820
    %834 = vmatprep.subr.bf16.mxu0 0
    %835 = vmatpush1.bf16.msra.mxu0 %v821
    %836 = vmatprep.subr.bf16.mxu0 0
    %837 = vmatpush1.bf16.msra.mxu0 %v822
    %838 = vmatprep.subr.bf16.mxu0 0
    %839 = vmatpush1.bf16.msra.mxu0 0
    %840 = vmatprep.subr.bf16.mxu0 0
    %841 = vmatpush1.bf16.msra.mxu0 0
    %842 = vmatprep.subr.bf16.mxu0 0
    %843 = vmatpush1.bf16.msra.mxu0 0
    %844 = vmatprep.subr.bf16.mxu0 0
    %845 = vmatpush1.bf16.msra.mxu0 0
    %846 = vmatprep.subr.bf16.mxu0 0
    %847 = vmatpush1.bf16.msra.mxu0 0
    %848 = vmatprep.subr.bf16.mxu0 0
    %849 = vmatpush1.bf16.msra.mxu0 0
    %850 = vmatprep.subr.bf16.mxu0 0
    %851 = vmatpush1.bf16.msra.mxu0 0
    %852 = vmatprep.subr.bf16.mxu0 0
    %853 = vmatpush1.bf16.msra.mxu0 0
    %854 = vmatprep.subr.bf16.mxu0 0
    %855 = vmatpush1.bf16.msra.mxu0 0
    %856 = vmatprep.subr.bf16.mxu0 0
    %857 = vmatpush1.bf16.msra.mxu0 0
    %858 = vmatprep.subr.bf16.mxu0 0
    %859 = vmatpush1.bf16.msra.mxu0 0
    %860 = vmatprep.subr.bf16.mxu0 0
    %861 = vmatpush1.bf16.msra.mxu0 0
    %862 = vmatprep.mubr.bf16.mxu0 0
    %863 = vmatmul.mubr.bf16.gmra.mrb[0].mxu0 %v828
    %v864 = vpop.f32.mrb[0].mxu0
    %v865 = vadd.f32 %v801, %v864
    %v866 = vpop.f32.mrb[0].mxu0
    %v867 = vpop.f32.mrb[0].mxu0
    %v868 = vpop.f32.mrb[0].mxu0
    %869 = vdwg.mxu0
    %v870 = vmax.f32 %v865, 0.0
    %v871 = vpack.c.bf16 %v870, %v870
    %v872 = vld [vmem:[%s9] sm:$0xf]
    %v873 = vld [vmem:[%s9 + $0x4] sm:$0xf]
    %v874 = vld [vmem:[%s9 + $0x8] sm:$0xf]
    %v875 = vld [vmem:[%s9 + $0xc] sm:$0xf]
    %v876 = vld [vmem:[%s9 + $0x10] sm:$0xf]
    %v877 = vld [vmem:[%s9 + $0x14] sm:$0xf]
    %v878 = vld [vmem:[%s9 + $0x18] sm:$0xf]
    %v879 = vld [vmem:[%s9 + $0x1c] sm:$0xf]
    %v880 = vld [vmem:[%s10] sm:$0x1]
    %v882 = vlaneseq
    %v883 = vshrl.u32 %v882, 7
    %v884 = vsub.s32 0, %v883
    %v885 = vrot.slane %v880, %v884
    %v895 = vunpack.c.l.b16 %v872
    %v896 = vunpack.c.l.b16 %v873
    %v897 = vunpack.c.l.b16 %v874
    %v898 = vunpack.c.l.b16 %v875
    %v899 = vunpack.c.l.b16 %v876
    %v900 = vunpack.c.l.b16 %v877
    %v901 = vunpack.c.l.b16 %v878
    %v902 = vunpack.c.l.b16 %v879
    %v903 = vpack.c.b16 %v896, %v895
    %v904 = vpack.c.b16 %v898, %v897
    %v905 = vpack.c.b16 %v900, %v899
    %v906 = vpack.c.b16 %v902, %v901
    %v912 = vsel %vm658, %v871, 0
    %914 = vmatprep.subr.bf16.mxu0 0
    %915 = vmatpush1.bf16.msra.mxu0 %v903
    %916 = vmatprep.subr.bf16.mxu0 0
    %917 = vmatpush1.bf16.msra.mxu0 %v904
    %918 = vmatprep.subr.bf16.mxu0 0
    %919 = vmatpush1.bf16.msra.mxu0 %v905
    %920 = vmatprep.subr.bf16.mxu0 0
    %921 = vmatpush1.bf16.msra.mxu0 %v906
    %922 = vmatprep.subr.bf16.mxu0 0
    %923 = vmatpush1.bf16.msra.mxu0 0
    %924 = vmatprep.subr.bf16.mxu0 0
    %925 = vmatpush1.bf16.msra.mxu0 0
    %926 = vmatprep.subr.bf16.mxu0 0
    %927 = vmatpush1.bf16.msra.mxu0 0
    %928 = vmatprep.subr.bf16.mxu0 0
    %929 = vmatpush1.bf16.msra.mxu0 0
    %930 = vmatprep.subr.bf16.mxu0 0
    %931 = vmatpush1.bf16.msra.mxu0 0
    %932 = vmatprep.subr.bf16.mxu0 0
    %933 = vmatpush1.bf16.msra.mxu0 0
    %934 = vmatprep.subr.bf16.mxu0 0
    %935 = vmatpush1.bf16.msra.mxu0 0
    %936 = vmatprep.subr.bf16.mxu0 0
    %937 = vmatpush1.bf16.msra.mxu0 0
    %938 = vmatprep.subr.bf16.mxu0 0
    %939 = vmatpush1.bf16.msra.mxu0 0
    %940 = vmatprep.subr.bf16.mxu0 0
    %941 = vmatpush1.bf16.msra.mxu0 0
    %942 = vmatprep.subr.bf16.mxu0 0
    %943 = vmatpush1.bf16.msra.mxu0 0
    %944 = vmatprep.subr.bf16.mxu0 0
    %945 = vmatpush1.bf16.msra.mxu0 0
    %946 = vmatprep.mubr.bf16.mxu0 0
    %947 = vmatmul.mubr.bf16.gmra.mrb[0].mxu0 %v912
    %v948 = vpop.f32.mrb[0].mxu0
    %v949 = vadd.f32 %v885, %v948
    %v950 = vpop.f32.mrb[0].mxu0
    %v951 = vpop.f32.mrb[0].mxu0
    %v952 = vpop.f32.mrb[0].mxu0
    %953 = vdwg.mxu0
    %954 = vmax.xlane.f32.xlu0 %v949
    %v955 = vpop.xlane.xlu0 %954
    %v956 = vsub.f32 %v949, %v955
    %v957 = vmul.f32 %v956, 1.442695
    %v958 = vpow.pop %v957
    %959 = vadd.xlane.f32.xlu0 %v958
    %v960 = vpop.xlane.xlu0 %959
    %v961 = vlog2.pop %v960
    %v962 = vmul.f32 %v961, 0.6931472
    %v963 = vsub.f32 %v956, %v962
    %964 = vst [vmem:[#allocation2] sm:$0xff] %v963
    // Predicated region
    $region46: #{net_forward.1} parent=1 // pred_check
      _
    $region47: #{net_forward.1} parent=1 // pred_check_branch
      %966 = sbr.rel (0) target = $region49
    $region48: #{net_forward.1} parent=1 // pred_region
      %s968 = ssub.s32 128, 128
      %969 = vsyncadd [#allocation3], %s968
      %s971 = sshll.u32 [#allocation2], 4
      %s972 = int_to_ptr.vmem [resolvable:$true] %s971
      %974 = dma.vmem_to_hbm [thread:$0]  %s972, 128, %s11, [#allocation3]
    $region49: #{net_forward.1} parent=1 // pred_fallthru
      _
    // Predicated region
    $region50: #{net_forward.1} parent=1 // pred_check
      _
    $region51: #{net_forward.1} parent=1 // pred_check_branch
      %976 = sbr.rel (0) target = $region53
    $region52: #{net_forward.1} parent=1 // pred_region
      %977 = dma.done [#allocation3], 128
    $region53: #{net_forward.1} parent=1 // pred_fallthru
      _
    %978 = vsyncpa [#allocation3], 1

</llo_original>
